<compile_context>
chip_gen: v7x
topology: tpu7x:2x2x1
jax: 0.10.0
libtpu: 0.0.40
codegen_flags: <defaults>
</compile_context>

<pallas_src>
import functools
import math

import jax
import jax.numpy as jnp
from jax.experimental import pallas as pl
from jax.experimental.pallas import tpu as pltpu


def _lstm0_kernel(x_ref, w_ref, b_ref, cell_ref, hide_ref, *, act_dtype):
    # x_ref:    (1, Cin, t_hw)   pixels on the lane axis
    # w_ref:    (3*ngf, Cin)     fused gate weights (gx | ix | ox), pre-transposed
    # b_ref:    (3*ngf, 1)       fused gate biases
    # outputs:  (1, ngf, t_hw)
    x = x_ref[0]
    w = w_ref[...]
    b = b_ref[...]

    ngf = cell_ref.shape[1]

    # One fused MXU matmul for all three gates: (3*ngf, Cin) @ (Cin, t_hw).
    acts = jnp.dot(w, x, preferred_element_type=jnp.float32) + b
    # Optional reduced-precision transcendental chain (EUP lever on v6e/v7x).
    acts = acts.astype(act_dtype)

    gx = jnp.tanh(acts[:ngf, :])
    ix = jax.nn.sigmoid(acts[ngf:2 * ngf, :])
    ox = jax.nn.sigmoid(acts[2 * ngf:, :])

    # Matches the PyTorch module: cell = tanh(tanh(gx) * sigmoid(ix)),
    # hide = sigmoid(ox) * cell  (the "double tanh" is intentional per spec).
    cell = jnp.tanh(gx * ix)
    hide = ox * cell

    cell_ref[0] = cell.astype(cell_ref.dtype)
    hide_ref[0] = hide.astype(hide_ref.dtype)


def _pick_lane_tile(hw, batch, max_t):
    """Lane-axis tile size.

    * hw <= max_t           -> full-extent block (always legal).
    * hw % 128 == 0         -> largest 128-multiple divisor of hw <= max_t.
    * otherwise             -> fixed 128-multiple tile, cdiv grid, masked
                               partial last block.
    * If (batch * n_steps) would be 1 and hw >= 256, split the spatial axis so
      the parallel grid has >= 2 steps (keeps both v7x TensorCores busy).
    """
    max_t = max(128, (max_t // 128) * 128)
    if hw <= max_t:
        t = hw
    elif hw % 128 == 0:
        t = 128
        cand = max_t
        while cand >= 128:
            if hw % cand == 0:
                t = cand
                break
            cand -= 128
    else:
        t = max_t  # partial last block, stores masked by Pallas

    if batch * pl.cdiv(hw, t) < 2 and hw >= 256:
        t = min(t, ((pl.cdiv(hw, 2) + 127) // 128) * 128)
    return t


def lstm0_pallas(xt, params, *, act_dtype=jnp.float32, out_dtype=None,
                 max_lane_tile=8192):
    """xt: (B, Cin, H, W) f32 NCHW.  Returns (cell_1, hide_1), each (B, ngf, H, W)."""
    wg, bg, wi, bi, wo, bo = (params["wg"], params["bg"], params["wi"],
                              params["bi"], params["wo"], params["bo"])
    B, Cin, H, W = xt.shape
    ngf = wg.shape[1]
    HW = H * W
    out_dtype = xt.dtype if out_dtype is None else out_dtype

    # Fuse the three 1x1-conv gates into one weight / bias, pre-transposed for
    # (3*ngf, Cin) @ (Cin, HW) orientation (spatial on lanes).
    w_fused = jnp.concatenate([wg, wi, wo], axis=1).T            # (3*ngf, Cin)
    b_fused = jnp.concatenate([bg, bi, bo]).reshape(3 * ngf, 1)  # (3*ngf, 1)

    # NCHW -> (B, Cin, H*W): free reshape, no transpose, no padding/copy of x.
    x3 = xt.reshape(B, Cin, HW)

    # Per-lane-column VMEM bytes: x double-buffered (2*Cin), two double-buffered
    # outputs (4*ngf), fused acts + gate temporaries (~8*ngf), all f32.
    per_col_bytes = 4 * (2 * Cin + 12 * ngf)
    budget = 24 * 1024 * 1024                       # generation-safe (v7x 64 MiB VMEM)
    max_fit = max(128, (budget // per_col_bytes) // 128 * 128)
    t_hw = _pick_lane_tile(HW, B, min(max_lane_tile, max_fit))

    grid = (B, pl.cdiv(HW, t_hw))

    x_spec = pl.BlockSpec((1, Cin, t_hw), lambda b, j: (b, 0, j))
    w_spec = pl.BlockSpec((3 * ngf, Cin), lambda b, j: (0, 0))
    b_spec = pl.BlockSpec((3 * ngf, 1), lambda b, j: (0, 0))
    out_spec = pl.BlockSpec((1, ngf, t_hw), lambda b, j: (b, 0, j))

    est_vmem = per_col_bytes * t_hw + 2 * 4 * (3 * ngf * Cin + 3 * ngf) + (1 << 20)
    vmem_limit = int(min(max(32 * 1024 * 1024, 2 * est_vmem), 56 * 1024 * 1024))

    kernel = functools.partial(_lstm0_kernel, act_dtype=act_dtype)

    cell_flat, hide_flat = pl.pallas_call(
        kernel,
        out_shape=(jax.ShapeDtypeStruct((B, ngf, HW), out_dtype),
                   jax.ShapeDtypeStruct((B, ngf, HW), out_dtype)),
        grid_spec=pltpu.PrefetchScalarGridSpec(
            num_scalar_prefetch=0,
            grid=grid,
            in_specs=[x_spec, w_spec, b_spec],
            out_specs=[out_spec, out_spec],
        ),
        compiler_params=pltpu.CompilerParams(
            dimension_semantics=("parallel", "parallel"),
            vmem_limit_bytes=vmem_limit),
    )(x3, w_fused, b_fused)

    # (B, ngf, H*W) -> (B, ngf, H, W): free reshape, no transpose.
    return cell_flat.reshape(B, ngf, H, W), hide_flat.reshape(B, ngf, H, W)


def init_params(key, in_c=5, ngf=32):
    """Deterministic init mirroring nn.Conv2d default (uniform +/- 1/sqrt(fan_in)),
    kernel_size=1 so weights are stored as (Cin, Cout) matrices."""
    cin = in_c + ngf
    bound = 1.0 / math.sqrt(cin)  # fan_in = cin * 1 * 1
    keys = jax.random.split(key, 6)
    u = lambda k, shape: jax.random.uniform(k, shape, jnp.float32, -bound, bound)
    return {
        "wg": u(keys[0], (cin, ngf)), "bg": u(keys[1], (ngf,)),
        "wi": u(keys[2], (cin, ngf)), "bi": u(keys[3], (ngf,)),
        "wo": u(keys[4], (cin, ngf)), "bo": u(keys[5], (ngf,)),
    }


def lstm0_reference(xt, params):
    """Pure-JAX reference of the PyTorch forward (1x1 convs as channel matmuls)."""
    gate = lambda w, b: (jnp.einsum('bchw,co->bohw', xt, w)
                         + b[None, :, None, None])
    gx = jnp.tanh(gate(params["wg"], params["bg"]))
    ix = jax.nn.sigmoid(gate(params["wi"], params["bi"]))
    ox = jax.nn.sigmoid(gate(params["wo"], params["bo"]))
    cell = jnp.tanh(gx * ix)
    hide = ox * cell
    return cell, hide


if __name__ == "__main__":
    in_c, ngf = 5, 32
    B, H, W = 2, 16, 16
    cin = in_c + ngf  # 37: the conv layers expect in_c + ngf input channels

    key = jax.random.PRNGKey(0)
    kx, kp, kx2 = jax.random.split(key, 3)
    xt = jax.random.normal(kx, (B, cin, H, W), jnp.float32)
    params = init_params(kp, in_c=in_c, ngf=ngf)

    # --- default f32 path: strict check against the pure-JAX reference ---
    cell_1, hide_1 = jax.jit(lstm0_pallas)(xt, params)
    jax.block_until_ready((cell_1, hide_1))
    cell_ref, hide_ref = lstm0_reference(xt, params)
    assert cell_1.shape == (B, ngf, H, W) and hide_1.shape == (B, ngf, H, W)
    assert jnp.allclose(cell_1, cell_ref, atol=1e-5, rtol=1e-5)
    assert jnp.allclose(hide_1, hide_ref, atol=1e-5, rtol=1e-5)

    # --- non-128-divisible H*W, B=1: exercises the cdiv grid with a masked
    # partial last block and the >=2-step spatial split (v7x dual-TC) ---
    xt2 = jax.random.normal(kx2, (1, cin, 40, 36), jnp.float32)
    cell_2, hide_2 = jax.jit(lstm0_pallas)(xt2, params)
    jax.block_until_ready((cell_2, hide_2))
    cell_ref2, hide_ref2 = lstm0_reference(xt2, params)
    assert jnp.allclose(cell_2, cell_ref2, atol=1e-5, rtol=1e-5)
    assert jnp.allclose(hide_2, hide_ref2, atol=1e-5, rtol=1e-5)

    # --- reduced-precision activation path (v6e/v7x EUP lever), loose check ---
    cell_b, hide_b = jax.jit(
        functools.partial(lstm0_pallas, act_dtype=jnp.bfloat16))(xt, params)
    jax.block_until_ready((cell_b, hide_b))
    assert jnp.allclose(cell_b, cell_ref, atol=6e-2, rtol=6e-2)
    assert jnp.allclose(hide_b, hide_ref, atol=6e-2, rtol=6e-2)

    print("KERNEL_OK")
</pallas_src>

<mosaic_0001>
module attributes {stable_mosaic.version = 11 : i64} {
  func.func @_lstm0_kernel(%arg0: i32, %arg1: i32, %arg2: memref<1x37x256xf32, #tpu.memory_space<vmem>>, %arg3: memref<96x37xf32, #tpu.memory_space<vmem>>, %arg4: memref<96x1xf32, #tpu.memory_space<vmem>>, %arg5: memref<1x32x256xf32, #tpu.memory_space<vmem>>, %arg6: memref<1x32x256xf32, #tpu.memory_space<vmem>>) attributes {dimension_semantics = [#tpu.dimension_semantics<parallel>, #tpu.dimension_semantics<parallel>], iteration_bounds = array<i64: 2, 1>, scalar_prefetch = 0 : i64, scratch_operands = 0 : i64, tpu.core_type = #tpu.core_type<tc>, window_params = [{transform_indices = @transform_0, window_bounds = array<i64: 1, 37, 256>}, {pipeline_mode = #tpu.pipeline_mode<synchronous>, transform_indices = @transform_1, window_bounds = array<i64: 96, 37>}, {pipeline_mode = #tpu.pipeline_mode<synchronous>, transform_indices = @transform_2, window_bounds = array<i64: 96, 1>}, {transform_indices = @transform_3, window_bounds = array<i64: 1, 32, 256>}, {transform_indices = @transform_4, window_bounds = array<i64: 1, 32, 256>}]} {
    %c0 = arith.constant 0 : index
    %c0_0 = arith.constant 0 : index
    %c0_1 = arith.constant 0 : index
    %0 = vector.load %arg2[%c0, %c0_0, %c0_1] : memref<1x37x256xf32, #tpu.memory_space<vmem>>, vector<1x37x256xf32>
    %1 = vector.shape_cast %0 : vector<1x37x256xf32> to vector<37x256xf32>
    %c0_2 = arith.constant 0 : index
    %c0_3 = arith.constant 0 : index
    %2 = vector.load %arg3[%c0_2, %c0_3] : memref<96x37xf32, #tpu.memory_space<vmem>>, vector<96x37xf32>
    %c0_4 = arith.constant 0 : index
    %c0_5 = arith.constant 0 : index
    %3 = vector.load %arg4[%c0_4, %c0_5] : memref<96x1xf32, #tpu.memory_space<vmem>>, vector<96x1xf32>
    %cst = arith.constant dense<0.000000e+00> : vector<96x256xf32>
    %4 = tpu.matmul %2, %1, %cst {dimension_numbers = #tpu.dot_dimension_numbers<[1], [0], [0], [1], [0, 0, 1, 1], [], []>} : vector<96x37xf32>, vector<37x256xf32>, vector<96x256xf32> -> vector<96x256xf32>
    %5 = vector.broadcast %3 : vector<96x1xf32> to vector<96x256xf32>
    %6 = arith.addf %4, %5 : vector<96x256xf32>
    %7 = vector.extract_strided_slice %6 {offsets = [0, 0], sizes = [32, 256], strides = [1, 1]} : vector<96x256xf32> to vector<32x256xf32>
    %8 = math.tanh %7 : vector<32x256xf32>
    %9 = vector.extract_strided_slice %6 {offsets = [32, 0], sizes = [32, 256], strides = [1, 1]} : vector<96x256xf32> to vector<32x256xf32>
    %10 = arith.negf %9 : vector<32x256xf32>
    %11 = math.exp %10 : vector<32x256xf32>
    %cst_6 = arith.constant 1.000000e+00 : f32
    %12 = vector.broadcast %cst_6 : f32 to vector<32x256xf32>
    %13 = arith.addf %12, %11 : vector<32x256xf32>
    %14 = arith.divf %12, %13 : vector<32x256xf32>
    %15 = vector.extract_strided_slice %6 {offsets = [64, 0], sizes = [32, 256], strides = [1, 1]} : vector<96x256xf32> to vector<32x256xf32>
    %16 = arith.negf %15 : vector<32x256xf32>
    %17 = math.exp %16 : vector<32x256xf32>
    %cst_7 = arith.constant 1.000000e+00 : f32
    %18 = vector.broadcast %cst_7 : f32 to vector<32x256xf32>
    %19 = arith.addf %18, %17 : vector<32x256xf32>
    %20 = arith.divf %18, %19 : vector<32x256xf32>
    %21 = arith.mulf %8, %14 : vector<32x256xf32>
    %22 = math.tanh %21 : vector<32x256xf32>
    %23 = arith.mulf %20, %22 : vector<32x256xf32>
    %c0_8 = arith.constant 0 : index
    %c0_9 = arith.constant 0 : index
    %c0_10 = arith.constant 0 : index
    %24 = vector.load %arg5[%c0_8, %c0_9, %c0_10] : memref<1x32x256xf32, #tpu.memory_space<vmem>>, vector<1x32x256xf32>
    %25 = vector.shape_cast %24 : vector<1x32x256xf32> to vector<32x256xf32>
    %26 = vector.shape_cast %22 : vector<32x256xf32> to vector<1x32x256xf32>
    tpu.vector_store %arg5[%c0_8, %c0_9, %c0_10], %26 {strides = array<i32>} : memref<1x32x256xf32, #tpu.memory_space<vmem>>, vector<1x32x256xf32>,
    %c0_11 = arith.constant 0 : index
    %c0_12 = arith.constant 0 : index
    %c0_13 = arith.constant 0 : index
    %27 = vector.load %arg6[%c0_11, %c0_12, %c0_13] : memref<1x32x256xf32, #tpu.memory_space<vmem>>, vector<1x32x256xf32>
    %28 = vector.shape_cast %27 : vector<1x32x256xf32> to vector<32x256xf32>
    %29 = vector.shape_cast %23 : vector<32x256xf32> to vector<1x32x256xf32>
    tpu.vector_store %arg6[%c0_11, %c0_12, %c0_13], %29 {strides = array<i32>} : memref<1x32x256xf32, #tpu.memory_space<vmem>>, vector<1x32x256xf32>,
    return
  }
  func.func @transform_0(%arg0: i32, %arg1: i32) -> (i32, i32, i32) {
    %c0_i32 = arith.constant 0 : i32
    %c0_i32_0 = arith.constant 0 : i32
    return %arg0, %c0_i32, %arg1 : i32, i32, i32
  }
  func.func @transform_1(%arg0: i32, %arg1: i32) -> (i32, i32) {
    %c0_i32 = arith.constant 0 : i32
    %c0_i32_0 = arith.constant 0 : i32
    %c0_i32_1 = arith.constant 0 : i32
    return %c0_i32, %c0_i32_0 : i32, i32
  }
  func.func @transform_2(%arg0: i32, %arg1: i32) -> (i32, i32) {
    %c0_i32 = arith.constant 0 : i32
    %c0_i32_0 = arith.constant 0 : i32
    %c0_i32_1 = arith.constant 0 : i32
    return %c0_i32, %c0_i32_0 : i32, i32
  }
  func.func @transform_3(%arg0: i32, %arg1: i32) -> (i32, i32, i32) {
    %c0_i32 = arith.constant 0 : i32
    %c0_i32_0 = arith.constant 0 : i32
    return %arg0, %c0_i32, %arg1 : i32, i32, i32
  }
  func.func @transform_4(%arg0: i32, %arg1: i32) -> (i32, i32, i32) {
    %c0_i32 = arith.constant 0 : i32
    %c0_i32_0 = arith.constant 0 : i32
    return %arg0, %c0_i32, %arg1 : i32, i32, i32
  }
}

</mosaic_0001>

<llo_original>
// kernel: lstm0_pallas.1
$region0: #{lstm0_pallas.1}
  #allocation0 [shape = 'u32[]', space=smem, size = 0x4, offset = 0x4, fixed_abs, tag = 'smem constant byte address 0x4 - core index']
  #allocation1 [shape = 'u32[144,128]{1,0:T(1,128)}', space=vmem, size = 0x12000, scoped, tag = 'internal scratch']
  %s0 = inlined_call_operand.vmem [shape: f32[2,37,256], index: 0, kind: input, shape index: {}]
  %s1 = inlined_call_operand.vmem [shape: f32[96,37], index: 1, kind: input, shape index: {}]
  %s2 = inlined_call_operand.vmem [shape: f32[96,1], index: 2, kind: input, shape index: {}]
  %s3 = inlined_call_operand.vmem [shape: f32[2,32,256], index: 3, kind: output, shape index: {0}]
  %s4 = inlined_call_operand.vmem [shape: f32[2,32,256], index: 4, kind: output, shape index: {1}]
  %5 = xla_tuple %s3, %s4
  %s6 = sld [smem:[#allocation0]]
  $region53: #{lstm0_pallas.1} parent=0
    _
  %s8 = ssub.s32 1, %s6
  %s9 = scalar_select 0, %s8, %s6
  loop: start=0, step=1, limit=4
  $region2: #{lstm0_pallas.1} parent=0 // loop_pre_header
    _
  $region3: #{lstm0_pallas.1} parent=0 // loop_header
    %s11 = sphi 0, %s15
    %p12 = scmp.ge.s32.totalorder %s11, 4
    %s18 = sphi 0, %s30
    %s19 = sphi 0, %s26
    %s20 = sphi 0, %s18
    %s21 = sphi 0, %s19
    %s22 = sphi 0, %s20
    %s23 = sphi 0, %s21
    %s35 = sphi 0, %s37
    %s38 = sphi 0, %s35
    %s39 = sphi 0, %s38
    %s55 = sphi 0, %s39
    %s59 = sphi 0, %s59
    %s61 = sphi 0, %s59
    %s62 = sphi 0, %s61
    %s76 = sphi 0, %s62
    %s80 = sphi 0, %s80
    %s82 = sphi 0, %s80
    %s83 = sphi 0, %s82
    %s97 = sphi 0, %s83
    %s105 = sphi 0, %s107
    %s108 = sphi 0, %s105
    %s109 = sphi 0, %s108
    %s125 = sphi 0, %s109
    %s133 = sphi 0, %s135
    %s136 = sphi 0, %s133
    %s137 = sphi 0, %s136
    %s153 = sphi 0, %s137
  $region4: #{lstm0_pallas.1} parent=0 // loop_header_branch
    %14 = sbr.rel (%p12) target = $region8
  $region5: #{lstm0_pallas.1} parent=0 // loop_body
    %s16 = ssub.s32 %s11, 1
    %s17 = ssub.s32 %s11, 2
    %s24 = sadd.s32 1, %s19
    %p25 = scmp.ge.s32.totalorder %s24, 1
    %s26 = scalar_select %p25, 0, %s24
    %s27 = sadd.s32 1, %s18
    %s28 = scalar_select %p25, %s27, %s18
    %p29 = scmp.ge.s32.totalorder %s28, 2
    %s30 = scalar_select %p29, 0, %s28
    %s31 = ssub.s32 %s18, %s30
    %s32 = ssub.s32 %s19, %s26
    %s33 = sor.u32 %s31, %s32
    %p34 = scmp.eq.s32.totalorder %s33, 0
    %s36 = sadd.s32 %s35, 1
    %s37 = scalar_select %p34, %s35, %s36
    %p40 = pneg %p34
    %p41 = scmp.eq.s32.totalorder %s11, 1
    %p42 = por %p40, %p41
    %p43 = scmp.ne.s32.totalorder %s35, %s38
    %p44 = scmp.eq.s32.totalorder %s11, 0
    %p45 = por %p43, %p44
    %p46 = scmp.ne.s32.totalorder %s35, %s38
    %p47 = scmp.eq.s32.totalorder %s16, 1
    %p48 = por %p46, %p47
    %p49 = scmp.ne.s32.totalorder %s38, %s39
    %p50 = scmp.eq.s32.totalorder %s16, 0
    %p51 = por %p49, %p50
    %p52 = scmp.ne.s32.totalorder %s38, %s39
    %p53 = scmp.eq.s32.totalorder %s17, 1
    %p54 = por %p52, %p53
    %p56 = scmp.ne.s32.totalorder %s39, %s55
    %p57 = scmp.eq.s32.totalorder %s17, 0
    %p58 = por %p56, %p57
    %s60 = sadd.s32 %s59, 1
    %p63 = scmp.eq.s32.totalorder %s11, 1
    %p64 = scmp.ne.s32.totalorder %s59, %s61
    %p65 = scmp.eq.s32.totalorder %s11, 0
    %p66 = por %p64, %p65
    %p67 = scmp.ne.s32.totalorder %s59, %s61
    %p68 = scmp.eq.s32.totalorder %s16, 1
    %p69 = por %p67, %p68
    %p70 = scmp.ne.s32.totalorder %s61, %s62
    %p71 = scmp.eq.s32.totalorder %s16, 0
    %p72 = por %p70, %p71
    %p73 = scmp.ne.s32.totalorder %s61, %s62
    %p74 = scmp.eq.s32.totalorder %s17, 1
    %p75 = por %p73, %p74
    %p77 = scmp.ne.s32.totalorder %s62, %s76
    %p78 = scmp.eq.s32.totalorder %s17, 0
    %p79 = por %p77, %p78
    %s81 = sadd.s32 %s80, 1
    %p84 = scmp.eq.s32.totalorder %s11, 1
    %p85 = scmp.ne.s32.totalorder %s80, %s82
    %p86 = scmp.eq.s32.totalorder %s11, 0
    %p87 = por %p85, %p86
    %p88 = scmp.ne.s32.totalorder %s80, %s82
    %p89 = scmp.eq.s32.totalorder %s16, 1
    %p90 = por %p88, %p89
    %p91 = scmp.ne.s32.totalorder %s82, %s83
    %p92 = scmp.eq.s32.totalorder %s16, 0
    %p93 = por %p91, %p92
    %p94 = scmp.ne.s32.totalorder %s82, %s83
    %p95 = scmp.eq.s32.totalorder %s17, 1
    %p96 = por %p94, %p95
    %p98 = scmp.ne.s32.totalorder %s83, %s97
    %p99 = scmp.eq.s32.totalorder %s17, 0
    %p100 = por %p98, %p99
    %s101 = ssub.s32 %s18, %s30
    %s102 = ssub.s32 %s19, %s26
    %s103 = sor.u32 %s101, %s102
    %p104 = scmp.eq.s32.totalorder %s103, 0
    %s106 = sadd.s32 %s105, 1
    %s107 = scalar_select %p104, %s105, %s106
    %p110 = pneg %p104
    %p111 = scmp.eq.s32.totalorder %s11, 1
    %p112 = por %p110, %p111
    %p113 = scmp.ne.s32.totalorder %s105, %s108
    %p114 = scmp.eq.s32.totalorder %s11, 0
    %p115 = por %p113, %p114
    %p116 = scmp.ne.s32.totalorder %s105, %s108
    %p117 = scmp.eq.s32.totalorder %s16, 1
    %p118 = por %p116, %p117
    %p119 = scmp.ne.s32.totalorder %s108, %s109
    %p120 = scmp.eq.s32.totalorder %s16, 0
    %p121 = por %p119, %p120
    %p122 = scmp.ne.s32.totalorder %s108, %s109
    %p123 = scmp.eq.s32.totalorder %s17, 1
    %p124 = por %p122, %p123
    %p126 = scmp.ne.s32.totalorder %s109, %s125
    %p127 = scmp.eq.s32.totalorder %s17, 0
    %p128 = por %p126, %p127
    %s129 = ssub.s32 %s18, %s30
    %s130 = ssub.s32 %s19, %s26
    %s131 = sor.u32 %s129, %s130
    %p132 = scmp.eq.s32.totalorder %s131, 0
    %s134 = sadd.s32 %s133, 1
    %s135 = scalar_select %p132, %s133, %s134
    %p138 = pneg %p132
    %p139 = scmp.eq.s32.totalorder %s11, 1
    %p140 = por %p138, %p139
    %p141 = scmp.ne.s32.totalorder %s133, %s136
    %p142 = scmp.eq.s32.totalorder %s11, 0
    %p143 = por %p141, %p142
    %p144 = scmp.ne.s32.totalorder %s133, %s136
    %p145 = scmp.eq.s32.totalorder %s16, 1
    %p146 = por %p144, %p145
    %p147 = scmp.ne.s32.totalorder %s136, %s137
    %p148 = scmp.eq.s32.totalorder %s16, 0
    %p149 = por %p147, %p148
    %p150 = scmp.ne.s32.totalorder %s136, %s137
    %p151 = scmp.eq.s32.totalorder %s17, 1
    %p152 = por %p150, %p151
    %p154 = scmp.ne.s32.totalorder %s137, %s153
    %p155 = scmp.eq.s32.totalorder %s17, 0
    %p156 = por %p154, %p155
    %p157 = scmp.le.s32.totalorder 1, %s11
    %p158 = scmp.lt.s32.totalorder %s11, 3
    %p159 = pnand %p157, %p158
    %p160 = pneg %p159
    // Predicated region
    $region9: #{lstm0_pallas.1} parent=5 // pred_check
      _
    $region10: #{lstm0_pallas.1} parent=5 // pred_check_branch
      %162 = sbr.rel (%p159) target = $region12
    $region11: #{lstm0_pallas.1} parent=5 // pred_region
      %s163 = ssub.s32 %s11, 1
      // Predicated region
      $region13: #{lstm0_pallas.1} parent=11 // pred_check
        %p164 = pneg %p72
      $region14: #{lstm0_pallas.1} parent=11 // pred_check_branch
        %166 = sbr.rel (%p164) target = $region16
      $region15: #{lstm0_pallas.1} parent=11 // pred_region
        _
      $region16: #{lstm0_pallas.1} parent=11 // pred_fallthru
        _
      // Predicated region
      $region17: #{lstm0_pallas.1} parent=11 // pred_check
        %p167 = pneg %p93
      $region18: #{lstm0_pallas.1} parent=11 // pred_check_branch
        %169 = sbr.rel (%p167) target = $region20
      $region19: #{lstm0_pallas.1} parent=11 // pred_region
        _
      $region20: #{lstm0_pallas.1} parent=11 // pred_fallthru
        _
    $region12: #{lstm0_pallas.1} parent=5 // pred_fallthru
      _
    %p170 = scmp.lt.s32.totalorder %s11, 2
    // Predicated region
    $region21: #{lstm0_pallas.1} parent=5 // pred_check
      %p171 = pneg %p170
    $region22: #{lstm0_pallas.1} parent=5 // pred_check_branch
      %173 = sbr.rel (%p171) target = $region24
    $region23: #{lstm0_pallas.1} parent=5 // pred_region
      // Predicated region
      $region25: #{lstm0_pallas.1} parent=23 // pred_check
        %p174 = pneg %p45
      $region26: #{lstm0_pallas.1} parent=23 // pred_check_branch
        %176 = sbr.rel (%p174) target = $region28
      $region27: #{lstm0_pallas.1} parent=23 // pred_region
        %s177 = smul.u32 2, %s19
        %p178 = scmp.lt.s32.totalorder %s18, 1
        %s179 = scalar_select %p178, %s18, 1
        %p180 = scmp.lt.s32.totalorder %s177, 1
        %s181 = scalar_select %p180, %s177, 1
        %s182 = smul.addr %s179, 10
        %s183 = sadd.s32 %s181, %s182
        %s184 = smul.addr %s183, 8
        %s185 = scalar_lea.vmem %s0, %s184
        %s186 = smul.u32 2, %s19
      $region28: #{lstm0_pallas.1} parent=23 // pred_fallthru
        _
    $region24: #{lstm0_pallas.1} parent=5 // pred_fallthru
      _
    %p187 = scmp.le.s32.totalorder 1, %s11
    %p188 = scmp.lt.s32.totalorder %s11, 3
    %p189 = pnand %p187, %p188
    %p190 = pneg %p189
    // Predicated region
    $region29: #{lstm0_pallas.1} parent=5 // pred_check
      _
    $region30: #{lstm0_pallas.1} parent=5 // pred_check_branch
      %192 = sbr.rel (%p189) target = $region32
    $region31: #{lstm0_pallas.1} parent=5 // pred_region
      %s193 = ssub.s32 %s11, 1
      %s194 = smul.u32 2, %s21
      %p195 = scmp.lt.s32.totalorder %s20, 1
      %s196 = scalar_select %p195, %s20, 1
      %p197 = scmp.lt.s32.totalorder %s194, 1
      %s198 = scalar_select %p197, %s194, 1
      %s199 = smul.addr %s196, 10
      %s200 = sadd.s32 %s198, %s199
      %s201 = smul.addr %s200, 8
      %s202 = scalar_lea.vmem %s0, %s201
      %p203 = pneg %p51
      %p204 = pneg %p48
      %p205 = pneg %p72
      %p206 = pneg %p69
      %p207 = pneg %p93
      %p208 = pneg %p90
      %p209 = pneg %p121
      %p210 = pneg %p118
      %s211 = smul.u32 2, %s21
      %p212 = scmp.lt.s32.totalorder %s20, 1
      %s213 = scalar_select %p212, %s20, 1
      %p214 = scmp.lt.s32.totalorder %s211, 1
      %s215 = scalar_select %p214, %s211, 1
      %s216 = smul.addr %s213, 8
      %s217 = sadd.s32 %s215, %s216
      %s218 = smul.addr %s217, 8
      %s219 = scalar_lea.vmem %s3, %s218
      %p220 = pneg %p149
      %p221 = pneg %p146
      %s222 = smul.u32 2, %s21
      %p223 = scmp.lt.s32.totalorder %s20, 1
      %s224 = scalar_select %p223, %s20, 1
      %p225 = scmp.lt.s32.totalorder %s222, 1
      %s226 = scalar_select %p225, %s222, 1
      %s227 = smul.addr %s224, 8
      %s228 = sadd.s32 %s226, %s227
      %s229 = smul.addr %s228, 8
      %s230 = scalar_lea.vmem %s4, %s229
      %s231 = smul.u32 2, %s21
      %p232 = scmp.lt.s32.totalorder %s20, 1
      %s233 = scalar_select %p232, %s20, 1
      %p234 = scmp.lt.s32.totalorder %s231, 1
      %s235 = scalar_select %p234, %s231, 1
      %s236 = smul.addr %s233, 10
      %s237 = sadd.s32 %s235, %s236
      %s238 = smul.addr %s237, 8
      %s239 = scalar_lea.vmem %s0, %s238
      %s240 = smul.u32 2, %s21
      %s241 = smul.u32 2, %s21
      %p242 = scmp.lt.s32.totalorder %s20, 1
      %s243 = scalar_select %p242, %s20, 1
      %p244 = scmp.lt.s32.totalorder %s241, 1
      %s245 = scalar_select %p244, %s241, 1
      %s246 = smul.addr %s243, 8
      %s247 = sadd.s32 %s245, %s246
      %s248 = smul.addr %s247, 8
      %s249 = scalar_lea.vmem %s3, %s248
      %s250 = smul.u32 2, %s21
      %s251 = smul.u32 2, %s21
      %p252 = scmp.lt.s32.totalorder %s20, 1
      %s253 = scalar_select %p252, %s20, 1
      %p254 = scmp.lt.s32.totalorder %s251, 1
      %s255 = scalar_select %p254, %s251, 1
      %s256 = smul.addr %s253, 8
      %s257 = sadd.s32 %s255, %s256
      %s258 = smul.addr %s257, 8
      %s259 = scalar_lea.vmem %s4, %s258
      %s260 = smul.u32 2, %s21
      %v261 = vld [vmem:[%s239] sm:$0xff]
      %v262 = vld [vmem:[%s239 + $0x8] sm:$0xff]
      %v263 = vld [vmem:[%s239 + $0x10] sm:$0xff]
      %v264 = vld [vmem:[%s239 + $0x18] sm:$0xff]
      %v265 = vld [vmem:[%s239 + $0x20] sm:$0xff]
      %v266 = vld [vmem:[%s239 + $0x28] sm:$0xff]
      %v267 = vld [vmem:[%s239 + $0x30] sm:$0xff]
      %v268 = vld [vmem:[%s239 + $0x38] sm:$0xff]
      %v269 = vld [vmem:[%s239 + $0x40] sm:$0x1f]
      %v270 = vld [vmem:[%s239 + $0x48] sm:$0x1f]
      %v271 = vld [vmem:[%s1] sm:$0xff]
      %v272 = vld [vmem:[%s1 + $0x8] sm:$0xff]
      %v273 = vld [vmem:[%s1 + $0x10] sm:$0xff]
      %v274 = vld [vmem:[%s1 + $0x18] sm:$0xff]
      %v275 = vld [vmem:[%s1 + $0x20] sm:$0xff]
      %v276 = vld [vmem:[%s1 + $0x28] sm:$0xff]
      %v277 = vld [vmem:[%s1 + $0x30] sm:$0xff]
      %v278 = vld [vmem:[%s1 + $0x38] sm:$0xff]
      %v279 = vld [vmem:[%s1 + $0x40] sm:$0xff]
      %v280 = vld [vmem:[%s1 + $0x48] sm:$0xff]
      %v281 = vld [vmem:[%s1 + $0x50] sm:$0xff]
      %v282 = vld [vmem:[%s1 + $0x58] sm:$0xff]
      %v283 = vld [vmem:[%s2] sm:$0xff]
      %v284 = vld [vmem:[%s2 + $0x8] sm:$0xff]
      %v285 = vld [vmem:[%s2 + $0x10] sm:$0xff]
      %v286 = vld [vmem:[%s2 + $0x18] sm:$0xff]
      %v287 = vld [vmem:[%s2 + $0x20] sm:$0xff]
      %v288 = vld [vmem:[%s2 + $0x28] sm:$0xff]
      %v289 = vld [vmem:[%s2 + $0x30] sm:$0xff]
      %v290 = vld [vmem:[%s2 + $0x38] sm:$0xff]
      %v291 = vld [vmem:[%s2 + $0x40] sm:$0xff]
      %v292 = vld [vmem:[%s2 + $0x48] sm:$0xff]
      %v293 = vld [vmem:[%s2 + $0x50] sm:$0xff]
      %v294 = vld [vmem:[%s2 + $0x58] sm:$0xff]
      %296 = vset.pattern.permute.xlu0 0
      %297 = vperm.xlu0 %296, %v283
      %v298 = vpop.permute.xlu0 %297
      %301 = vset.pattern.permute.xlu0 0
      %302 = vperm.xlu0 %301, %v284
      %v303 = vpop.permute.xlu0 %302
      %306 = vset.pattern.permute.xlu0 0
      %307 = vperm.xlu0 %306, %v285
      %v308 = vpop.permute.xlu0 %307
      %311 = vset.pattern.permute.xlu0 0
      %312 = vperm.xlu0 %311, %v286
      %v313 = vpop.permute.xlu0 %312
      %316 = vset.pattern.permute.xlu0 0
      %317 = vperm.xlu0 %316, %v287
      %v318 = vpop.permute.xlu0 %317
      %321 = vset.pattern.permute.xlu0 0
      %322 = vperm.xlu0 %321, %v288
      %v323 = vpop.permute.xlu0 %322
      %326 = vset.pattern.permute.xlu0 0
      %327 = vperm.xlu0 %326, %v289
      %v328 = vpop.permute.xlu0 %327
      %331 = vset.pattern.permute.xlu0 0
      %332 = vperm.xlu0 %331, %v290
      %v333 = vpop.permute.xlu0 %332
      %336 = vset.pattern.permute.xlu0 0
      %337 = vperm.xlu0 %336, %v291
      %v338 = vpop.permute.xlu0 %337
      %341 = vset.pattern.permute.xlu0 0
      %342 = vperm.xlu0 %341, %v292
      %v343 = vpop.permute.xlu0 %342
      %346 = vset.pattern.permute.xlu0 0
      %347 = vperm.xlu0 %346, %v293
      %v348 = vpop.permute.xlu0 %347
      %351 = vset.pattern.permute.xlu0 0
      %352 = vperm.xlu0 %351, %v294
      %v353 = vpop.permute.xlu0 %352
      %vm355 = vcmask 302080
      %v357 = vsel %vm355, %v271, 0
      %v360 = vsel %vm355, %v272, 0
      %v363 = vsel %vm355, %v273, 0
      %v366 = vsel %vm355, %v274, 0
      %v369 = vsel %vm355, %v275, 0
      %v372 = vsel %vm355, %v276, 0
      %v375 = vsel %vm355, %v277, 0
      %v378 = vsel %vm355, %v278, 0
      %v381 = vsel %vm355, %v279, 0
      %v384 = vsel %vm355, %v280, 0
      %v387 = vsel %vm355, %v281, 0
      %v390 = vsel %vm355, %v282, 0
      %vm392 = vcmask 1044480
      %v394 = vsel %vm392, %v269, 0
      %v397 = vsel %vm392, %v270, 0
      %399 = vmatprep.subr.mxu0 %v262
      %400 = vmatpush1.msra.mxu0 %v261
      %401 = vmatprep.subr.mxu0 %v264
      %402 = vmatpush1.msra.mxu0 %v263
      %403 = vmatprep.subr.mxu0 %v266
      %404 = vmatpush1.msra.mxu0 %v265
      %405 = vmatprep.subr.mxu0 %v268
      %406 = vmatpush1.msra.mxu0 %v267
      %407 = vmatprep.subr.mxu0 %v397
      %408 = vmatpush1.msra.mxu0 %v394
      %409 = vmatprep.subr.mxu0 0.0
      %410 = vmatpush1.msra.mxu0 0.0
      %411 = vmatprep.subr.mxu0 0.0
      %412 = vmatpush1.msra.mxu0 0.0
      %413 = vmatprep.subr.mxu0 0.0
      %414 = vmatpush1.msra.mxu0 0.0
      %415 = vmatprep.subr.mxu0 0.0
      %416 = vmatpush1.msra.mxu0 0.0
      %417 = vmatprep.subr.mxu0 0.0
      %418 = vmatpush1.msra.mxu0 0.0
      %419 = vmatprep.subr.mxu0 0.0
      %420 = vmatpush1.msra.mxu0 0.0
      %421 = vmatprep.subr.mxu0 0.0
      %422 = vmatpush1.msra.mxu0 0.0
      %423 = vmatprep.subr.mxu0 0.0
      %424 = vmatpush1.msra.mxu0 0.0
      %425 = vmatprep.subr.mxu0 0.0
      %426 = vmatpush1.msra.mxu0 0.0
      %427 = vmatprep.subr.mxu0 0.0
      %428 = vmatpush1.msra.mxu0 0.0
      %429 = vmatprep.subr.mxu0 0.0
      %430 = vmatpush1.msra.mxu0 0.0
      %431 = vmatprep.subr.mxu0 0.0
      %432 = vmatpush1.msra.mxu0 0.0
      %433 = vmatprep.subr.mxu0 0.0
      %434 = vmatpush1.msra.mxu0 0.0
      %435 = vmatprep.subr.mxu0 0.0
      %436 = vmatpush1.msra.mxu0 0.0
      %437 = vmatprep.subr.mxu0 0.0
      %438 = vmatpush1.msra.mxu0 0.0
      %439 = vmatprep.subr.mxu0 0.0
      %440 = vmatpush1.msra.mxu0 0.0
      %441 = vmatprep.subr.mxu0 0.0
      %442 = vmatpush1.msra.mxu0 0.0
      %443 = vmatprep.subr.mxu0 0.0
      %444 = vmatpush1.msra.mxu0 0.0
      %445 = vmatprep.subr.mxu0 0.0
      %446 = vmatpush1.msra.mxu0 0.0
      %447 = vmatprep.subr.mxu0 0.0
      %448 = vmatpush1.msra.mxu0 0.0
      %449 = vmatprep.subr.mxu0 0.0
      %450 = vmatpush1.msra.mxu0 0.0
      %451 = vmatprep.subr.mxu0 0.0
      %452 = vmatpush1.msra.mxu0 0.0
      %453 = vmatprep.subr.mxu0 0.0
      %454 = vmatpush1.msra.mxu0 0.0
      %455 = vmatprep.subr.mxu0 0.0
      %456 = vmatpush1.msra.mxu0 0.0
      %457 = vmatprep.subr.mxu0 0.0
      %458 = vmatpush1.msra.mxu0 0.0
      %459 = vmatprep.subr.mxu0 0.0
      %460 = vmatpush1.msra.mxu0 0.0
      %461 = vmatprep.subr.mxu0 0.0
      %462 = vmatpush1.msra.mxu0 0.0
      %463 = vmatprep.mubr.f32.mxu0 0.0
      %464 = vmatmul.mubr.f32.gmra.mrb[0].mxu0 %v357
      %v465 = vpop.f32.mrb[0].mxu0
      %v466 = vadd.f32 %v298, %v465
      %v467 = vpop.f32.mrb[0].mxu0
      %v468 = vadd.f32 %v298, %v467
      %469 = vmatprep.mubr.f32.mxu0 0.0
      %470 = vmatmul.mubr.f32.gmra.mrb[0].mxu0 %v360
      %v471 = vpop.f32.mrb[0].mxu0
      %v472 = vadd.f32 %v303, %v471
      %v473 = vpop.f32.mrb[0].mxu0
      %v474 = vadd.f32 %v303, %v473
      %475 = vmatprep.mubr.f32.mxu0 0.0
      %476 = vmatmul.mubr.f32.gmra.mrb[0].mxu0 %v363
      %v477 = vpop.f32.mrb[0].mxu0
      %v478 = vadd.f32 %v308, %v477
      %v479 = vpop.f32.mrb[0].mxu0
      %v480 = vadd.f32 %v308, %v479
      %481 = vmatprep.mubr.f32.mxu0 0.0
      %482 = vmatmul.mubr.f32.gmra.mrb[0].mxu0 %v366
      %v483 = vpop.f32.mrb[0].mxu0
      %v484 = vadd.f32 %v313, %v483
      %v485 = vpop.f32.mrb[0].mxu0
      %v486 = vadd.f32 %v313, %v485
      %487 = vmatprep.mubr.f32.mxu0 0.0
      %488 = vmatmul.mubr.f32.gmra.mrb[0].mxu0 %v369
      %v489 = vpop.f32.mrb[0].mxu0
      %v490 = vadd.f32 %v318, %v489
      %v491 = vpop.f32.mrb[0].mxu0
      %v492 = vadd.f32 %v318, %v491
      %493 = vmatprep.mubr.f32.mxu0 0.0
      %494 = vmatmul.mubr.f32.gmra.mrb[0].mxu0 %v372
      %v495 = vpop.f32.mrb[0].mxu0
      %v496 = vadd.f32 %v323, %v495
      %v497 = vpop.f32.mrb[0].mxu0
      %v498 = vadd.f32 %v323, %v497
      %499 = vmatprep.mubr.f32.mxu0 0.0
      %500 = vmatmul.mubr.f32.gmra.mrb[0].mxu0 %v375
      %v501 = vpop.f32.mrb[0].mxu0
      %v502 = vadd.f32 %v328, %v501
      %v503 = vpop.f32.mrb[0].mxu0
      %v504 = vadd.f32 %v328, %v503
      %505 = vmatprep.mubr.f32.mxu0 0.0
      %506 = vmatmul.mubr.f32.gmra.mrb[0].mxu0 %v378
      %v507 = vpop.f32.mrb[0].mxu0
      %v508 = vadd.f32 %v333, %v507
      %v509 = vpop.f32.mrb[0].mxu0
      %v510 = vadd.f32 %v333, %v509
      %511 = vmatprep.mubr.f32.mxu0 0.0
      %512 = vmatmul.mubr.f32.gmra.mrb[0].mxu0 %v381
      %v513 = vpop.f32.mrb[0].mxu0
      %v514 = vadd.f32 %v338, %v513
      %v515 = vpop.f32.mrb[0].mxu0
      %v516 = vadd.f32 %v338, %v515
      %517 = vmatprep.mubr.f32.mxu0 0.0
      %518 = vmatmul.mubr.f32.gmra.mrb[0].mxu0 %v384
      %v519 = vpop.f32.mrb[0].mxu0
      %v520 = vadd.f32 %v343, %v519
      %v521 = vpop.f32.mrb[0].mxu0
      %v522 = vadd.f32 %v343, %v521
      %523 = vmatprep.mubr.f32.mxu0 0.0
      %524 = vmatmul.mubr.f32.gmra.mrb[0].mxu0 %v387
      %v525 = vpop.f32.mrb[0].mxu0
      %v526 = vadd.f32 %v348, %v525
      %v527 = vpop.f32.mrb[0].mxu0
      %v528 = vadd.f32 %v348, %v527
      %529 = vmatprep.mubr.f32.mxu0 0.0
      %530 = vmatmul.mubr.f32.gmra.mrb[0].mxu0 %v390
      %v531 = vpop.f32.mrb[0].mxu0
      %v532 = vadd.f32 %v353, %v531
      %v533 = vpop.f32.mrb[0].mxu0
      %v534 = vadd.f32 %v353, %v533
      %535 = vdwg.mxu0
      %v536 = vtanh.pop %v466
      %v537 = vtanh.pop %v468
      %v538 = vtanh.pop %v472
      %v539 = vtanh.pop %v474
      %v540 = vtanh.pop %v478
      %v541 = vtanh.pop %v480
      %v542 = vtanh.pop %v484
      %v543 = vtanh.pop %v486
      %v544 = vxor.u32 %v490, 2147483648
      %v545 = vxor.u32 %v492, 2147483648
      %v546 = vxor.u32 %v496, 2147483648
      %v547 = vxor.u32 %v498, 2147483648
      %v548 = vxor.u32 %v502, 2147483648
      %v549 = vxor.u32 %v504, 2147483648
      %v550 = vxor.u32 %v508, 2147483648
      %v551 = vxor.u32 %v510, 2147483648
      %v552 = vmul.f32 %v544, 1.442695
      %v553 = vpow.pop %v552
      %v554 = vmul.f32 %v545, 1.442695
      %v555 = vpow.pop %v554
      %v556 = vmul.f32 %v546, 1.442695
      %v557 = vpow.pop %v556
      %v558 = vmul.f32 %v547, 1.442695
      %v559 = vpow.pop %v558
      %v560 = vmul.f32 %v548, 1.442695
      %v561 = vpow.pop %v560
      %v562 = vmul.f32 %v549, 1.442695
      %v563 = vpow.pop %v562
      %v564 = vmul.f32 %v550, 1.442695
      %v565 = vpow.pop %v564
      %v566 = vmul.f32 %v551, 1.442695
      %v567 = vpow.pop %v566
      %v568 = vadd.f32 %v553, 1.0
      %v569 = vadd.f32 %v555, 1.0
      %v570 = vadd.f32 %v557, 1.0
      %v571 = vadd.f32 %v559, 1.0
      %v572 = vadd.f32 %v561, 1.0
      %v573 = vadd.f32 %v563, 1.0
      %v574 = vadd.f32 %v565, 1.0
      %v575 = vadd.f32 %v567, 1.0
      %v576 = vrcp.pop %v568
      %v577 = vmul.f32 1.0, %v576
      %v578 = vrcp.pop %v569
      %v579 = vmul.f32 1.0, %v578
      %v580 = vrcp.pop %v570
      %v581 = vmul.f32 1.0, %v580
      %v582 = vrcp.pop %v571
      %v583 = vmul.f32 1.0, %v582
      %v584 = vrcp.pop %v572
      %v585 = vmul.f32 1.0, %v584
      %v586 = vrcp.pop %v573
      %v587 = vmul.f32 1.0, %v586
      %v588 = vrcp.pop %v574
      %v589 = vmul.f32 1.0, %v588
      %v590 = vrcp.pop %v575
      %v591 = vmul.f32 1.0, %v590
      %v592 = vxor.u32 %v514, 2147483648
      %v593 = vxor.u32 %v516, 2147483648
      %v594 = vxor.u32 %v520, 2147483648
      %v595 = vxor.u32 %v522, 2147483648
      %v596 = vxor.u32 %v526, 2147483648
      %v597 = vxor.u32 %v528, 2147483648
      %v598 = vxor.u32 %v532, 2147483648
      %v599 = vxor.u32 %v534, 2147483648
      %v600 = vmul.f32 %v592, 1.442695
      %v601 = vpow.pop %v600
      %v602 = vmul.f32 %v593, 1.442695
      %v603 = vpow.pop %v602
      %v604 = vmul.f32 %v594, 1.442695
      %v605 = vpow.pop %v604
      %v606 = vmul.f32 %v595, 1.442695
      %v607 = vpow.pop %v606
      %v608 = vmul.f32 %v596, 1.442695
      %v609 = vpow.pop %v608
      %v610 = vmul.f32 %v597, 1.442695
      %v611 = vpow.pop %v610
      %v612 = vmul.f32 %v598, 1.442695
      %v613 = vpow.pop %v612
      %v614 = vmul.f32 %v599, 1.442695
      %v615 = vpow.pop %v614
      %v616 = vadd.f32 %v601, 1.0
      %v617 = vadd.f32 %v603, 1.0
      %v618 = vadd.f32 %v605, 1.0
      %v619 = vadd.f32 %v607, 1.0
      %v620 = vadd.f32 %v609, 1.0
      %v621 = vadd.f32 %v611, 1.0
      %v622 = vadd.f32 %v613, 1.0
      %v623 = vadd.f32 %v615, 1.0
      %v624 = vrcp.pop %v616
      %v625 = vmul.f32 1.0, %v624
      %v626 = vrcp.pop %v617
      %v627 = vmul.f32 1.0, %v626
      %v628 = vrcp.pop %v618
      %v629 = vmul.f32 1.0, %v628
      %v630 = vrcp.pop %v619
      %v631 = vmul.f32 1.0, %v630
      %v632 = vrcp.pop %v620
      %v633 = vmul.f32 1.0, %v632
      %v634 = vrcp.pop %v621
      %v635 = vmul.f32 1.0, %v634
      %v636 = vrcp.pop %v622
      %v637 = vmul.f32 1.0, %v636
      %v638 = vrcp.pop %v623
      %v639 = vmul.f32 1.0, %v638
      %v640 = vmul.f32 %v536, %v577
      %v641 = vmul.f32 %v537, %v579
      %v642 = vmul.f32 %v538, %v581
      %v643 = vmul.f32 %v539, %v583
      %v644 = vmul.f32 %v540, %v585
      %v645 = vmul.f32 %v541, %v587
      %v646 = vmul.f32 %v542, %v589
      %v647 = vmul.f32 %v543, %v591
      %v648 = vtanh.pop %v640
      %v649 = vtanh.pop %v641
      %v650 = vtanh.pop %v642
      %v651 = vtanh.pop %v643
      %v652 = vtanh.pop %v644
      %v653 = vtanh.pop %v645
      %v654 = vtanh.pop %v646
      %v655 = vtanh.pop %v647
      %v656 = vmul.f32 %v625, %v648
      %v657 = vmul.f32 %v627, %v649
      %v658 = vmul.f32 %v629, %v650
      %v659 = vmul.f32 %v631, %v651
      %v660 = vmul.f32 %v633, %v652
      %v661 = vmul.f32 %v635, %v653
      %v662 = vmul.f32 %v637, %v654
      %v663 = vmul.f32 %v639, %v655
      %664 = vst [vmem:[%s249] sm:$0xff] %v648
      %665 = vst [vmem:[%s249 + $0x8] sm:$0xff] %v649
      %666 = vst [vmem:[%s249 + $0x10] sm:$0xff] %v650
      %667 = vst [vmem:[%s249 + $0x18] sm:$0xff] %v651
      %668 = vst [vmem:[%s249 + $0x20] sm:$0xff] %v652
      %669 = vst [vmem:[%s249 + $0x28] sm:$0xff] %v653
      %670 = vst [vmem:[%s249 + $0x30] sm:$0xff] %v654
      %671 = vst [vmem:[%s249 + $0x38] sm:$0xff] %v655
      %672 = vst [vmem:[%s259] sm:$0xff] %v656
      %673 = vst [vmem:[%s259 + $0x8] sm:$0xff] %v657
      %674 = vst [vmem:[%s259 + $0x10] sm:$0xff] %v658
      %675 = vst [vmem:[%s259 + $0x18] sm:$0xff] %v659
      %676 = vst [vmem:[%s259 + $0x20] sm:$0xff] %v660
      %677 = vst [vmem:[%s259 + $0x28] sm:$0xff] %v661
      %678 = vst [vmem:[%s259 + $0x30] sm:$0xff] %v662
      %679 = vst [vmem:[%s259 + $0x38] sm:$0xff] %v663
      %s680 = smul.u32 2, %s21
      %p681 = scmp.lt.s32.totalorder %s20, 1
      %s682 = scalar_select %p681, %s20, 1
      %p683 = scmp.lt.s32.totalorder %s680, 1
      %s684 = scalar_select %p683, %s680, 1
      %s685 = smul.addr %s682, 8
      %s686 = sadd.s32 %s684, %s685
      %s687 = smul.addr %s686, 8
      %s688 = scalar_lea.vmem %s3, %s687
      %s689 = smul.u32 2, %s21
      %p690 = scmp.lt.s32.totalorder %s20, 1
      %s691 = scalar_select %p690, %s20, 1
      %p692 = scmp.lt.s32.totalorder %s689, 1
      %s693 = scalar_select %p692, %s689, 1
      %s694 = smul.addr %s691, 8
      %s695 = sadd.s32 %s693, %s694
      %s696 = smul.addr %s695, 8
      %s697 = scalar_lea.vmem %s4, %s696
      // Predicated region
      $region33: #{lstm0_pallas.1} parent=31 // pred_check
        %p698 = pneg %p118
      $region34: #{lstm0_pallas.1} parent=31 // pred_check_branch
        %700 = sbr.rel (%p698) target = $region36
      $region35: #{lstm0_pallas.1} parent=31 // pred_region
        %s701 = smul.u32 2, %s21
      $region36: #{lstm0_pallas.1} parent=31 // pred_fallthru
        _
      // Predicated region
      $region37: #{lstm0_pallas.1} parent=31 // pred_check
        %p702 = pneg %p146
      $region38: #{lstm0_pallas.1} parent=31 // pred_check_branch
        %704 = sbr.rel (%p702) target = $region40
      $region39: #{lstm0_pallas.1} parent=31 // pred_region
        %s705 = smul.u32 2, %s21
      $region40: #{lstm0_pallas.1} parent=31 // pred_fallthru
        _
    $region32: #{lstm0_pallas.1} parent=5 // pred_fallthru
      _
    %p706 = scmp.le.s32.totalorder 2, %s11
    // Predicated region
    $region41: #{lstm0_pallas.1} parent=5 // pred_check
      %p707 = pneg %p706
    $region42: #{lstm0_pallas.1} parent=5 // pred_check_branch
      %709 = sbr.rel (%p707) target = $region44
    $region43: #{lstm0_pallas.1} parent=5 // pred_region
      %s710 = ssub.s32 %s11, 2
      // Predicated region
      $region45: #{lstm0_pallas.1} parent=43 // pred_check
        %p711 = pneg %p124
      $region46: #{lstm0_pallas.1} parent=43 // pred_check_branch
        %713 = sbr.rel (%p711) target = $region48
      $region47: #{lstm0_pallas.1} parent=43 // pred_region
        %s714 = smul.u32 2, %s23
        %p715 = scmp.lt.s32.totalorder %s22, 1
        %s716 = scalar_select %p715, %s22, 1
        %p717 = scmp.lt.s32.totalorder %s714, 1
        %s718 = scalar_select %p717, %s714, 1
        %s719 = smul.addr %s716, 8
        %s720 = sadd.s32 %s718, %s719
        %s721 = smul.addr %s720, 8
        %s722 = scalar_lea.vmem %s3, %s721
      $region48: #{lstm0_pallas.1} parent=43 // pred_fallthru
        _
      // Predicated region
      $region49: #{lstm0_pallas.1} parent=43 // pred_check
        %p723 = pneg %p152
      $region50: #{lstm0_pallas.1} parent=43 // pred_check_branch
        %725 = sbr.rel (%p723) target = $region52
      $region51: #{lstm0_pallas.1} parent=43 // pred_region
        %s726 = smul.u32 2, %s23
        %p727 = scmp.lt.s32.totalorder %s22, 1
        %s728 = scalar_select %p727, %s22, 1
        %p729 = scmp.lt.s32.totalorder %s726, 1
        %s730 = scalar_select %p729, %s726, 1
        %s731 = smul.addr %s728, 8
        %s732 = sadd.s32 %s730, %s731
        %s733 = smul.addr %s732, 8
        %s734 = scalar_lea.vmem %s4, %s733
      $region52: #{lstm0_pallas.1} parent=43 // pred_fallthru
        _
    $region44: #{lstm0_pallas.1} parent=5 // pred_fallthru
      _
  $region6: #{lstm0_pallas.1} parent=0 // loop_footer
    %s15 = sadd.s32 1, %s11
  $region7: #{lstm0_pallas.1} parent=0 // loop_footer_branch
    %10 = sbr.rel target = $region3
  $region8: #{lstm0_pallas.1} parent=0 // loop_exit
    _

</llo_original>
